<compile_context>
chip_gen: v7x
topology: tpu7x:2x2x1
jax: 0.10.0
libtpu: 0.0.40
codegen_flags: <defaults>
</compile_context>

<pallas_src>
import functools

import jax
import jax.numpy as jnp
from jax.experimental import pallas as pl
from jax.experimental.pallas import tpu as pltpu


# ---------------------------------------------------------------------------
# Fused kernel: avg-pool over L, squeeze-excite MLP, sigmoid gate, rescale x.
# ---------------------------------------------------------------------------
def _channel_attention_kernel(x_ref, w1_ref, w2_ref, o_ref):
    # Pool: sum over the lane axis; the 1/L scale is pre-folded into w1.
    y = jnp.sum(x_ref[...], axis=-1, dtype=jnp.float32)                    # (Bt, C)

    h = jnp.maximum(
        jnp.dot(y, w1_ref[...], preferred_element_type=jnp.float32), 0.0)  # (Bt, C//r)
    s = jax.nn.sigmoid(
        jnp.dot(h, w2_ref[...], preferred_element_type=jnp.float32))       # (Bt, C)

    # Re-read x_ref (VMEM loads are cheap: 3 vld slots/cycle) instead of keeping
    # the whole tile live across the MLP chain -> streams vreg-by-vreg.
    o_ref[...] = (x_ref[...] * s[:, :, None]).astype(o_ref.dtype)          # (Bt, C, L)


def channel_attention(x, w1_t, w2_t, *, batch_tile=256):
    """x: (B, C, L).  w1_t: (C, C//r).  w2_t: (C//r, C).  Returns (B, C, L)."""
    B, C, L = x.shape
    Cr = w1_t.shape[1]
    itemsize = jnp.dtype(x.dtype).itemsize

    # Cap the batch tile so double-buffered in+out blocks fit comfortably in VMEM
    # on every generation (v7x has only 64 MiB physical VMEM per TensorCore).
    per_row_bytes = C * L * itemsize
    vmem_block_budget = 40 << 20                       # in+out, double-buffered
    max_bt = max(1, vmem_block_budget // (4 * per_row_bytes))
    bt = max(1, min(batch_tile, B, max_bt))

    # Fold the 1/L average-pool scale into the first weight matrix (y/L @ W == y @ W/L).
    w1_scaled = w1_t.astype(jnp.float32) * jnp.float32(1.0 / L)
    w2_f32 = w2_t.astype(jnp.float32)

    weight_bytes = (C * Cr + Cr * C) * 4
    vmem_limit = 4 * bt * per_row_bytes + 4 * weight_bytes + (4 << 20)
    vmem_limit = int(min(max(vmem_limit, 16 << 20), 56 << 20))

    cost = pl.CostEstimate(
        flops=2 * B * C * (L + 2 * Cr),
        transcendentals=B * C,                          # sigmoid
        bytes_accessed=2 * B * C * L * itemsize + 2 * weight_bytes,
    )

    return pl.pallas_call(
        _channel_attention_kernel,
        out_shape=jax.ShapeDtypeStruct((B, C, L), x.dtype),
        grid_spec=pltpu.PrefetchScalarGridSpec(
            num_scalar_prefetch=0,
            grid=(pl.cdiv(B, bt),),
            in_specs=[
                pl.BlockSpec((bt, C, L), lambda i: (i, 0, 0)),
                pl.BlockSpec((C, Cr), lambda i: (0, 0)),
                pl.BlockSpec((Cr, C), lambda i: (0, 0)),
            ],
            out_specs=pl.BlockSpec((bt, C, L), lambda i: (i, 0, 0)),
        ),
        compiler_params=pltpu.CompilerParams(
            dimension_semantics=("parallel",),
            vmem_limit_bytes=vmem_limit,
        ),
        cost_estimate=cost,
    )(x, w1_scaled, w2_f32)


@functools.partial(jax.jit, static_argnames=("batch_tile",))
def channel_attention_forward(x, w1_t, w2_t, batch_tile=256):
    return channel_attention(x, w1_t, w2_t, batch_tile=batch_tile)


# ---------------------------------------------------------------------------
# Pure-JAX reference (mirrors the PyTorch module exactly).
# ---------------------------------------------------------------------------
def channel_attention_ref(x, w1, w2):
    """w1: (C//r, C), w2: (C, C//r) -- PyTorch nn.Linear (out, in) layout."""
    y = jnp.mean(x, axis=-1)                 # (B, C)
    y = jnp.maximum(y @ w1.T, 0.0)           # (B, C//r)
    y = jax.nn.sigmoid(y @ w2.T)             # (B, C)
    return x * y[:, :, None]


if __name__ == "__main__":
    key = jax.random.PRNGKey(0)
    kx, k1, k2 = jax.random.split(key, 3)

    B, C, L, R = 2, 64, 128, 4
    Cr = C // R

    x = jax.random.normal(kx, (B, C, L), jnp.float32)

    # nn.Linear(channel, channel//R, bias=False) weight is (C//R, C); second is (C, C//R).
    bound1 = 1.0 / jnp.sqrt(C)
    w1 = jax.random.uniform(k1, (Cr, C), jnp.float32, -bound1, bound1)
    bound2 = 1.0 / jnp.sqrt(Cr)
    w2 = jax.random.uniform(k2, (C, Cr), jnp.float32, -bound2, bound2)

    # Kernel takes pre-transposed (in_features, out_features) weights.
    out = jax.block_until_ready(channel_attention_forward(x, w1.T, w2.T))

    ref = channel_attention_ref(x, w1, w2)
    assert out.shape == (B, C, L), out.shape
    assert jnp.allclose(out, ref, atol=2e-5, rtol=1e-5), float(jnp.max(jnp.abs(out - ref)))

    print("KERNEL_OK")
</pallas_src>

<mosaic_0001>
module attributes {stable_mosaic.version = 11 : i64} {
  func.func @_channel_attention_kernel(%arg0: i32, %arg1: memref<2x64x128xf32, #tpu.memory_space<vmem>>, %arg2: memref<64x16xf32, #tpu.memory_space<vmem>>, %arg3: memref<16x64xf32, #tpu.memory_space<vmem>>, %arg4: memref<2x64x128xf32, #tpu.memory_space<vmem>>) attributes {dimension_semantics = [#tpu.dimension_semantics<parallel>], iteration_bounds = array<i64: 1>, scalar_prefetch = 0 : i64, scratch_operands = 0 : i64, tpu.core_type = #tpu.core_type<tc>, window_params = [{transform_indices = @transform_0, window_bounds = array<i64: 2, 64, 128>}, {pipeline_mode = #tpu.pipeline_mode<synchronous>, transform_indices = @transform_1, window_bounds = array<i64: 64, 16>}, {pipeline_mode = #tpu.pipeline_mode<synchronous>, transform_indices = @transform_2, window_bounds = array<i64: 16, 64>}, {transform_indices = @transform_3, window_bounds = array<i64: 2, 64, 128>}]} {
    %c0 = arith.constant 0 : index
    %c0_0 = arith.constant 0 : index
    %c0_1 = arith.constant 0 : index
    %0 = vector.load %arg1[%c0, %c0_0, %c0_1] : memref<2x64x128xf32, #tpu.memory_space<vmem>>, vector<2x64x128xf32>
    %cst = arith.constant dense<0.000000e+00> : vector<2x64xf32>
    %1 = vector.multi_reduction <add>, %0, %cst [2] : vector<2x64x128xf32> to vector<2x64xf32>
    %c0_2 = arith.constant 0 : index
    %c0_3 = arith.constant 0 : index
    %2 = vector.load %arg2[%c0_2, %c0_3] : memref<64x16xf32, #tpu.memory_space<vmem>>, vector<64x16xf32>
    %cst_4 = arith.constant dense<0.000000e+00> : vector<2x16xf32>
    %3 = tpu.matmul %1, %2, %cst_4 {dimension_numbers = #tpu.dot_dimension_numbers<[1], [0], [0], [1], [0, 0, 1, 1], [], []>} : vector<2x64xf32>, vector<64x16xf32>, vector<2x16xf32> -> vector<2x16xf32>
    %cst_5 = arith.constant 0.000000e+00 : f32
    %4 = vector.broadcast %cst_5 : f32 to vector<2x16xf32>
    %5 = arith.maximumf %3, %4 : vector<2x16xf32>
    %c0_6 = arith.constant 0 : index
    %c0_7 = arith.constant 0 : index
    %6 = vector.load %arg3[%c0_6, %c0_7] : memref<16x64xf32, #tpu.memory_space<vmem>>, vector<16x64xf32>
    %cst_8 = arith.constant dense<0.000000e+00> : vector<2x64xf32>
    %7 = tpu.matmul %5, %6, %cst_8 {dimension_numbers = #tpu.dot_dimension_numbers<[1], [0], [0], [1], [0, 0, 1, 1], [], []>} : vector<2x16xf32>, vector<16x64xf32>, vector<2x64xf32> -> vector<2x64xf32>
    %8 = arith.negf %7 : vector<2x64xf32>
    %9 = math.exp %8 : vector<2x64xf32>
    %cst_9 = arith.constant 1.000000e+00 : f32
    %10 = vector.broadcast %cst_9 : f32 to vector<2x64xf32>
    %11 = arith.addf %10, %9 : vector<2x64xf32>
    %12 = arith.divf %10, %11 : vector<2x64xf32>
    %c0_10 = arith.constant 0 : index
    %c0_11 = arith.constant 0 : index
    %c0_12 = arith.constant 0 : index
    %13 = vector.load %arg1[%c0_10, %c0_11, %c0_12] : memref<2x64x128xf32, #tpu.memory_space<vmem>>, vector<2x64x128xf32>
    %14 = vector.shape_cast %12 : vector<2x64xf32> to vector<2x64x1xf32>
    %15 = vector.broadcast %14 : vector<2x64x1xf32> to vector<2x64x128xf32>
    %16 = arith.mulf %13, %15 : vector<2x64x128xf32>
    %c0_13 = arith.constant 0 : index
    %c0_14 = arith.constant 0 : index
    %c0_15 = arith.constant 0 : index
    %17 = vector.load %arg4[%c0_13, %c0_14, %c0_15] : memref<2x64x128xf32, #tpu.memory_space<vmem>>, vector<2x64x128xf32>
    tpu.vector_store %arg4[%c0_13, %c0_14, %c0_15], %16 {strides = array<i32>} : memref<2x64x128xf32, #tpu.memory_space<vmem>>, vector<2x64x128xf32>,
    return
  }
  func.func @transform_0(%arg0: i32) -> (i32, i32, i32) {
    %c0_i32 = arith.constant 0 : i32
    %c0_i32_0 = arith.constant 0 : i32
    %c0_i32_1 = arith.constant 0 : i32
    return %arg0, %c0_i32, %c0_i32_0 : i32, i32, i32
  }
  func.func @transform_1(%arg0: i32) -> (i32, i32) {
    %c0_i32 = arith.constant 0 : i32
    %c0_i32_0 = arith.constant 0 : i32
    %c0_i32_1 = arith.constant 0 : i32
    return %c0_i32, %c0_i32_0 : i32, i32
  }
  func.func @transform_2(%arg0: i32) -> (i32, i32) {
    %c0_i32 = arith.constant 0 : i32
    %c0_i32_0 = arith.constant 0 : i32
    %c0_i32_1 = arith.constant 0 : i32
    return %c0_i32, %c0_i32_0 : i32, i32
  }
  func.func @transform_3(%arg0: i32) -> (i32, i32, i32) {
    %c0_i32 = arith.constant 0 : i32
    %c0_i32_0 = arith.constant 0 : i32
    %c0_i32_1 = arith.constant 0 : i32
    return %arg0, %c0_i32, %c0_i32_0 : i32, i32, i32
  }
}

</mosaic_0001>

<llo_original>
// kernel: channel_attention_forward.1
$region0: #{channel_attention_forward.1}
  #allocation0 [shape = 'u32[]', space=smem, size = 0x4, offset = 0x4, fixed_abs, tag = 'smem constant byte address 0x4 - core index']
  #allocation1 [shape = 'u32[144,128]{1,0:T(1,128)}', space=vmem, size = 0x12000, scoped, tag = 'internal scratch']
  %s0 = inlined_call_operand.vmem [shape: f32[2,64,128], index: 0, kind: input, shape index: {}]
  %s1 = inlined_call_operand.vmem [shape: f32[64,16], index: 1, kind: input, shape index: {}]
  %s2 = inlined_call_operand.vmem [shape: f32[16,64], index: 2, kind: input, shape index: {}]
  %s3 = inlined_call_operand.hbm [shape: f32[2,64,128], index: 3, kind: output, shape index: {}]
  %s4 = sld [smem:[#allocation0]]
  $region22: #{channel_attention_forward.1} parent=0
    _
  %s6 = ssub.s32 1, %s4
  %s7 = scalar_select 0, %s6, %s4
  $region1: #{channel_attention_forward.1} parent=0
    #allocation2 [shape = 'u8[65536]{0}', space=vmem, size = 0x10000, scoped, tag = 'output window, operand 0, single buffered']
    #allocation3 [shape = 's32[1]{0}', space=sflag, size = 0x4, scoped, tag = 'scoped memory for channel_attention_forward.1']
    %8 = vsyncpa [#allocation3], 0
    // Predicated region
    $region2: #{channel_attention_forward.1} parent=1 // pred_check
      _
    $region3: #{channel_attention_forward.1} parent=1 // pred_check_branch
      %10 = sbr.rel (0) target = $region5
    $region4: #{channel_attention_forward.1} parent=1 // pred_region
      _
    $region5: #{channel_attention_forward.1} parent=1 // pred_fallthru
      _
    // Predicated region
    $region6: #{channel_attention_forward.1} parent=1 // pred_check
      _
    $region7: #{channel_attention_forward.1} parent=1 // pred_check_branch
      %12 = sbr.rel (0) target = $region9
    $region8: #{channel_attention_forward.1} parent=1 // pred_region
      _
    $region9: #{channel_attention_forward.1} parent=1 // pred_fallthru
      _
    // Predicated region
    $region10: #{channel_attention_forward.1} parent=1 // pred_check
      _
    $region11: #{channel_attention_forward.1} parent=1 // pred_check_branch
      %14 = sbr.rel (0) target = $region13
    $region12: #{channel_attention_forward.1} parent=1 // pred_region
      _
    $region13: #{channel_attention_forward.1} parent=1 // pred_fallthru
      _
    %v15 = vld [vmem:[%s0] sm:$0xff]
    %v16 = vld [vmem:[%s0 + $0x8] sm:$0xff]
    %v17 = vld [vmem:[%s0 + $0x10] sm:$0xff]
    %v18 = vld [vmem:[%s0 + $0x18] sm:$0xff]
    %v19 = vld [vmem:[%s0 + $0x20] sm:$0xff]
    %v20 = vld [vmem:[%s0 + $0x28] sm:$0xff]
    %v21 = vld [vmem:[%s0 + $0x30] sm:$0xff]
    %v22 = vld [vmem:[%s0 + $0x38] sm:$0xff]
    %v23 = vld [vmem:[%s0 + $0x40] sm:$0xff]
    %v24 = vld [vmem:[%s0 + $0x48] sm:$0xff]
    %v25 = vld [vmem:[%s0 + $0x50] sm:$0xff]
    %v26 = vld [vmem:[%s0 + $0x58] sm:$0xff]
    %v27 = vld [vmem:[%s0 + $0x60] sm:$0xff]
    %v28 = vld [vmem:[%s0 + $0x68] sm:$0xff]
    %v29 = vld [vmem:[%s0 + $0x70] sm:$0xff]
    %v30 = vld [vmem:[%s0 + $0x78] sm:$0xff]
    %31 = vadd.xlane.f32.xlu0 %v15
    %v32 = vpop.xlane.xlu0 %31
    %33 = vadd.xlane.f32.xlu0 %v16
    %v34 = vpop.xlane.xlu0 %33
    %35 = vadd.xlane.f32.xlu0 %v17
    %v36 = vpop.xlane.xlu0 %35
    %37 = vadd.xlane.f32.xlu0 %v18
    %v38 = vpop.xlane.xlu0 %37
    %39 = vadd.xlane.f32.xlu0 %v19
    %v40 = vpop.xlane.xlu0 %39
    %41 = vadd.xlane.f32.xlu0 %v20
    %v42 = vpop.xlane.xlu0 %41
    %43 = vadd.xlane.f32.xlu0 %v21
    %v44 = vpop.xlane.xlu0 %43
    %45 = vadd.xlane.f32.xlu0 %v22
    %v46 = vpop.xlane.xlu0 %45
    %47 = vadd.xlane.f32.xlu0 %v23
    %v48 = vpop.xlane.xlu0 %47
    %49 = vadd.xlane.f32.xlu0 %v24
    %v50 = vpop.xlane.xlu0 %49
    %51 = vadd.xlane.f32.xlu0 %v25
    %v52 = vpop.xlane.xlu0 %51
    %53 = vadd.xlane.f32.xlu0 %v26
    %v54 = vpop.xlane.xlu0 %53
    %55 = vadd.xlane.f32.xlu0 %v27
    %v56 = vpop.xlane.xlu0 %55
    %57 = vadd.xlane.f32.xlu0 %v28
    %v58 = vpop.xlane.xlu0 %57
    %59 = vadd.xlane.f32.xlu0 %v29
    %v60 = vpop.xlane.xlu0 %59
    %61 = vadd.xlane.f32.xlu0 %v30
    %v62 = vpop.xlane.xlu0 %61
    %v63 = vld [vmem:[%s1] sm:$0xff]
    %v64 = vld [vmem:[%s1 + $0x8] sm:$0xff]
    %v65 = vld [vmem:[%s1 + $0x10] sm:$0xff]
    %v66 = vld [vmem:[%s1 + $0x18] sm:$0xff]
    %v67 = vld [vmem:[%s1 + $0x20] sm:$0xff]
    %v68 = vld [vmem:[%s1 + $0x28] sm:$0xff]
    %v69 = vld [vmem:[%s1 + $0x30] sm:$0xff]
    %v70 = vld [vmem:[%s1 + $0x38] sm:$0xff]
    %v87 = vlaneseq
    %v88 = vand.u32 %v87, 127
    %v89 = vlaneseq
    %v90 = vshrl.u32 %v89, 7
    %v91 = vsub.s32 %v88, %v90
    %v92 = vrot.slane %v32, %v91
    %v93 = vadd.s32 %v88, 4294967288
    %v94 = vlaneseq
    %v95 = vshrl.u32 %v94, 7
    %v96 = vsub.s32 %v93, %v95
    %v97 = vrot.slane %v34, %v96
    %vm98 = vcmask 130112
    %v99 = vsel %vm98, %v97, %v92
    %v100 = vadd.s32 %v88, 4294967280
    %v101 = vlaneseq
    %v102 = vshrl.u32 %v101, 7
    %v103 = vsub.s32 %v100, %v102
    %v104 = vrot.slane %v36, %v103
    %vm105 = vcmask 195712
    %v106 = vsel %vm105, %v104, %v99
    %v107 = vadd.s32 %v88, 4294967272
    %v108 = vlaneseq
    %v109 = vshrl.u32 %v108, 7
    %v110 = vsub.s32 %v107, %v109
    %v111 = vrot.slane %v38, %v110
    %vm112 = vcmask 261312
    %v113 = vsel %vm112, %v111, %v106
    %v114 = vadd.s32 %v88, 4294967264
    %v115 = vlaneseq
    %v116 = vshrl.u32 %v115, 7
    %v117 = vsub.s32 %v114, %v116
    %v118 = vrot.slane %v40, %v117
    %vm119 = vcmask 326912
    %v120 = vsel %vm119, %v118, %v113
    %v121 = vadd.s32 %v88, 4294967256
    %v122 = vlaneseq
    %v123 = vshrl.u32 %v122, 7
    %v124 = vsub.s32 %v121, %v123
    %v125 = vrot.slane %v42, %v124
    %vm126 = vcmask 392512
    %v127 = vsel %vm126, %v125, %v120
    %v128 = vadd.s32 %v88, 4294967248
    %v129 = vlaneseq
    %v130 = vshrl.u32 %v129, 7
    %v131 = vsub.s32 %v128, %v130
    %v132 = vrot.slane %v44, %v131
    %vm133 = vcmask 458112
    %v134 = vsel %vm133, %v132, %v127
    %v135 = vadd.s32 %v88, 4294967240
    %v136 = vlaneseq
    %v137 = vshrl.u32 %v136, 7
    %v138 = vsub.s32 %v135, %v137
    %v139 = vrot.slane %v46, %v138
    %vm140 = vcmask 523712
    %v141 = vsel %vm140, %v139, %v134
    %v142 = vlaneseq
    %v143 = vshrl.u32 %v142, 7
    %v144 = vsub.s32 %v88, %v143
    %v145 = vrot.slane %v48, %v144
    %v146 = vlaneseq
    %v147 = vshrl.u32 %v146, 7
    %v148 = vsub.s32 %v93, %v147
    %v149 = vrot.slane %v50, %v148
    %v150 = vsel %vm98, %v149, %v145
    %v151 = vlaneseq
    %v152 = vshrl.u32 %v151, 7
    %v153 = vsub.s32 %v100, %v152
    %v154 = vrot.slane %v52, %v153
    %v155 = vsel %vm105, %v154, %v150
    %v156 = vlaneseq
    %v157 = vshrl.u32 %v156, 7
    %v158 = vsub.s32 %v107, %v157
    %v159 = vrot.slane %v54, %v158
    %v160 = vsel %vm112, %v159, %v155
    %v161 = vlaneseq
    %v162 = vshrl.u32 %v161, 7
    %v163 = vsub.s32 %v114, %v162
    %v164 = vrot.slane %v56, %v163
    %v165 = vsel %vm119, %v164, %v160
    %v166 = vlaneseq
    %v167 = vshrl.u32 %v166, 7
    %v168 = vsub.s32 %v121, %v167
    %v169 = vrot.slane %v58, %v168
    %v170 = vsel %vm126, %v169, %v165
    %v171 = vlaneseq
    %v172 = vshrl.u32 %v171, 7
    %v173 = vsub.s32 %v128, %v172
    %v174 = vrot.slane %v60, %v173
    %v175 = vsel %vm133, %v174, %v170
    %v176 = vlaneseq
    %v177 = vshrl.u32 %v176, 7
    %v178 = vsub.s32 %v135, %v177
    %v179 = vrot.slane %v62, %v178
    %v180 = vsel %vm140, %v179, %v175
    %vm181 = vcmask 1041409
    %v182 = vsel %vm181, %v180, %v141
    %vm183 = vcmask 523264
    %v184 = vsel %vm183, %v182, 0
    %186 = vmatprep.subr.mxu0 0.0
    %187 = vmatpush1.msra.mxu0 %v63
    %188 = vmatprep.subr.mxu0 0.0
    %189 = vmatpush1.msra.mxu0 %v64
    %190 = vmatprep.subr.mxu0 0.0
    %191 = vmatpush1.msra.mxu0 %v65
    %192 = vmatprep.subr.mxu0 0.0
    %193 = vmatpush1.msra.mxu0 %v66
    %194 = vmatprep.subr.mxu0 0.0
    %195 = vmatpush1.msra.mxu0 %v67
    %196 = vmatprep.subr.mxu0 0.0
    %197 = vmatpush1.msra.mxu0 %v68
    %198 = vmatprep.subr.mxu0 0.0
    %199 = vmatpush1.msra.mxu0 %v69
    %200 = vmatprep.subr.mxu0 0.0
    %201 = vmatpush1.msra.mxu0 %v70
    %202 = vmatprep.subr.mxu0 0.0
    %203 = vmatpush1.msra.mxu0 0.0
    %204 = vmatprep.subr.mxu0 0.0
    %205 = vmatpush1.msra.mxu0 0.0
    %206 = vmatprep.subr.mxu0 0.0
    %207 = vmatpush1.msra.mxu0 0.0
    %208 = vmatprep.subr.mxu0 0.0
    %209 = vmatpush1.msra.mxu0 0.0
    %210 = vmatprep.subr.mxu0 0.0
    %211 = vmatpush1.msra.mxu0 0.0
    %212 = vmatprep.subr.mxu0 0.0
    %213 = vmatpush1.msra.mxu0 0.0
    %214 = vmatprep.subr.mxu0 0.0
    %215 = vmatpush1.msra.mxu0 0.0
    %216 = vmatprep.subr.mxu0 0.0
    %217 = vmatpush1.msra.mxu0 0.0
    %218 = vmatprep.subr.mxu0 0.0
    %219 = vmatpush1.msra.mxu0 0.0
    %220 = vmatprep.subr.mxu0 0.0
    %221 = vmatpush1.msra.mxu0 0.0
    %222 = vmatprep.subr.mxu0 0.0
    %223 = vmatpush1.msra.mxu0 0.0
    %224 = vmatprep.subr.mxu0 0.0
    %225 = vmatpush1.msra.mxu0 0.0
    %226 = vmatprep.subr.mxu0 0.0
    %227 = vmatpush1.msra.mxu0 0.0
    %228 = vmatprep.subr.mxu0 0.0
    %229 = vmatpush1.msra.mxu0 0.0
    %230 = vmatprep.subr.mxu0 0.0
    %231 = vmatpush1.msra.mxu0 0.0
    %232 = vmatprep.subr.mxu0 0.0
    %233 = vmatpush1.msra.mxu0 0.0
    %234 = vmatprep.subr.mxu0 0.0
    %235 = vmatpush1.msra.mxu0 0.0
    %236 = vmatprep.subr.mxu0 0.0
    %237 = vmatpush1.msra.mxu0 0.0
    %238 = vmatprep.subr.mxu0 0.0
    %239 = vmatpush1.msra.mxu0 0.0
    %240 = vmatprep.subr.mxu0 0.0
    %241 = vmatpush1.msra.mxu0 0.0
    %242 = vmatprep.subr.mxu0 0.0
    %243 = vmatpush1.msra.mxu0 0.0
    %244 = vmatprep.subr.mxu0 0.0
    %245 = vmatpush1.msra.mxu0 0.0
    %246 = vmatprep.subr.mxu0 0.0
    %247 = vmatpush1.msra.mxu0 0.0
    %248 = vmatprep.subr.mxu0 0.0
    %249 = vmatpush1.msra.mxu0 0.0
    %250 = vmatprep.mubr.f32.mxu0 0.0
    %251 = vmatmul.mubr.f32.gmra.mrb[0].mxu0 %v184
    %v252 = vpop.f32.mrb[0].mxu0
    %v253 = vadd.f32 0.0, %v252
    %v254 = vpop.f32.mrb[0].mxu0
    %255 = vdwg.mxu0
    %v256 = vmax.f32 %v253, 0.0
    %v257 = vld [vmem:[%s2] sm:$0xff]
    %v258 = vld [vmem:[%s2 + $0x8] sm:$0xff]
    %vm259 = vcmask 130048
    %v261 = vsel %vm259, %v256, 0
    %263 = vmatprep.subr.mxu0 0.0
    %264 = vmatpush1.msra.mxu0 %v257
    %265 = vmatprep.subr.mxu0 0.0
    %266 = vmatpush1.msra.mxu0 %v258
    %267 = vmatprep.subr.mxu0 0.0
    %268 = vmatpush1.msra.mxu0 0.0
    %269 = vmatprep.subr.mxu0 0.0
    %270 = vmatpush1.msra.mxu0 0.0
    %271 = vmatprep.subr.mxu0 0.0
    %272 = vmatpush1.msra.mxu0 0.0
    %273 = vmatprep.subr.mxu0 0.0
    %274 = vmatpush1.msra.mxu0 0.0
    %275 = vmatprep.subr.mxu0 0.0
    %276 = vmatpush1.msra.mxu0 0.0
    %277 = vmatprep.subr.mxu0 0.0
    %278 = vmatpush1.msra.mxu0 0.0
    %279 = vmatprep.subr.mxu0 0.0
    %280 = vmatpush1.msra.mxu0 0.0
    %281 = vmatprep.subr.mxu0 0.0
    %282 = vmatpush1.msra.mxu0 0.0
    %283 = vmatprep.subr.mxu0 0.0
    %284 = vmatpush1.msra.mxu0 0.0
    %285 = vmatprep.subr.mxu0 0.0
    %286 = vmatpush1.msra.mxu0 0.0
    %287 = vmatprep.subr.mxu0 0.0
    %288 = vmatpush1.msra.mxu0 0.0
    %289 = vmatprep.subr.mxu0 0.0
    %290 = vmatpush1.msra.mxu0 0.0
    %291 = vmatprep.subr.mxu0 0.0
    %292 = vmatpush1.msra.mxu0 0.0
    %293 = vmatprep.subr.mxu0 0.0
    %294 = vmatpush1.msra.mxu0 0.0
    %295 = vmatprep.subr.mxu0 0.0
    %296 = vmatpush1.msra.mxu0 0.0
    %297 = vmatprep.subr.mxu0 0.0
    %298 = vmatpush1.msra.mxu0 0.0
    %299 = vmatprep.subr.mxu0 0.0
    %300 = vmatpush1.msra.mxu0 0.0
    %301 = vmatprep.subr.mxu0 0.0
    %302 = vmatpush1.msra.mxu0 0.0
    %303 = vmatprep.subr.mxu0 0.0
    %304 = vmatpush1.msra.mxu0 0.0
    %305 = vmatprep.subr.mxu0 0.0
    %306 = vmatpush1.msra.mxu0 0.0
    %307 = vmatprep.subr.mxu0 0.0
    %308 = vmatpush1.msra.mxu0 0.0
    %309 = vmatprep.subr.mxu0 0.0
    %310 = vmatpush1.msra.mxu0 0.0
    %311 = vmatprep.subr.mxu0 0.0
    %312 = vmatpush1.msra.mxu0 0.0
    %313 = vmatprep.subr.mxu0 0.0
    %314 = vmatpush1.msra.mxu0 0.0
    %315 = vmatprep.subr.mxu0 0.0
    %316 = vmatpush1.msra.mxu0 0.0
    %317 = vmatprep.subr.mxu0 0.0
    %318 = vmatpush1.msra.mxu0 0.0
    %319 = vmatprep.subr.mxu0 0.0
    %320 = vmatpush1.msra.mxu0 0.0
    %321 = vmatprep.subr.mxu0 0.0
    %322 = vmatpush1.msra.mxu0 0.0
    %323 = vmatprep.subr.mxu0 0.0
    %324 = vmatpush1.msra.mxu0 0.0
    %325 = vmatprep.subr.mxu0 0.0
    %326 = vmatpush1.msra.mxu0 0.0
    %327 = vmatprep.mubr.f32.mxu0 0.0
    %328 = vmatmul.mubr.f32.gmra.mrb[0].mxu0 %v261
    %v329 = vpop.f32.mrb[0].mxu0
    %v330 = vadd.f32 0.0, %v329
    %v331 = vpop.f32.mrb[0].mxu0
    %332 = vdwg.mxu0
    %v333 = vxor.u32 %v330, 2147483648
    %v334 = vmul.f32 %v333, 1.442695
    %v335 = vpow.pop %v334
    %v336 = vadd.f32 %v335, 1.0
    %v337 = vrcp.pop %v336
    %v338 = vmul.f32 1.0, %v337
    %v339 = vlaneseq
    %v340 = vshrl.u32 %v339, 7
    %v341 = vsub.s32 0, %v340
    %v342 = vrot.slane %v338, %v341
    %344 = vbcast.lane.b32.xlu0 %v342, 256
    %v345 = vpop.permute.xlu0 %344
    %s347 = sor.u32 256, 8
    %348 = vbcast.lane.b32.xlu0 %v342, %s347
    %v349 = vpop.permute.xlu0 %348
    %s351 = sor.u32 256, 16
    %352 = vbcast.lane.b32.xlu0 %v342, %s351
    %v353 = vpop.permute.xlu0 %352
    %s355 = sor.u32 256, 24
    %356 = vbcast.lane.b32.xlu0 %v342, %s355
    %v357 = vpop.permute.xlu0 %356
    %s359 = sor.u32 256, 32
    %360 = vbcast.lane.b32.xlu0 %v342, %s359
    %v361 = vpop.permute.xlu0 %360
    %s363 = sor.u32 256, 40
    %364 = vbcast.lane.b32.xlu0 %v342, %s363
    %v365 = vpop.permute.xlu0 %364
    %s367 = sor.u32 256, 48
    %368 = vbcast.lane.b32.xlu0 %v342, %s367
    %v369 = vpop.permute.xlu0 %368
    %s371 = sor.u32 256, 56
    %372 = vbcast.lane.b32.xlu0 %v342, %s371
    %v373 = vpop.permute.xlu0 %372
    %v374 = vlaneseq
    %v375 = vshrl.u32 %v374, 7
    %v376 = vsub.s32 1, %v375
    %v377 = vrot.slane %v338, %v376
    %379 = vbcast.lane.b32.xlu0 %v377, 256
    %v380 = vpop.permute.xlu0 %379
    %s382 = sor.u32 256, 8
    %383 = vbcast.lane.b32.xlu0 %v377, %s382
    %v384 = vpop.permute.xlu0 %383
    %s386 = sor.u32 256, 16
    %387 = vbcast.lane.b32.xlu0 %v377, %s386
    %v388 = vpop.permute.xlu0 %387
    %s390 = sor.u32 256, 24
    %391 = vbcast.lane.b32.xlu0 %v377, %s390
    %v392 = vpop.permute.xlu0 %391
    %s394 = sor.u32 256, 32
    %395 = vbcast.lane.b32.xlu0 %v377, %s394
    %v396 = vpop.permute.xlu0 %395
    %s398 = sor.u32 256, 40
    %399 = vbcast.lane.b32.xlu0 %v377, %s398
    %v400 = vpop.permute.xlu0 %399
    %s402 = sor.u32 256, 48
    %403 = vbcast.lane.b32.xlu0 %v377, %s402
    %v404 = vpop.permute.xlu0 %403
    %s406 = sor.u32 256, 56
    %407 = vbcast.lane.b32.xlu0 %v377, %s406
    %v408 = vpop.permute.xlu0 %407
    %v409 = vmul.f32 %v15, %v345
    %v410 = vmul.f32 %v16, %v349
    %v411 = vmul.f32 %v17, %v353
    %v412 = vmul.f32 %v18, %v357
    %v413 = vmul.f32 %v19, %v361
    %v414 = vmul.f32 %v20, %v365
    %v415 = vmul.f32 %v21, %v369
    %v416 = vmul.f32 %v22, %v373
    %v417 = vmul.f32 %v23, %v380
    %v418 = vmul.f32 %v24, %v384
    %v419 = vmul.f32 %v25, %v388
    %v420 = vmul.f32 %v26, %v392
    %v421 = vmul.f32 %v27, %v396
    %v422 = vmul.f32 %v28, %v400
    %v423 = vmul.f32 %v29, %v404
    %v424 = vmul.f32 %v30, %v408
    %425 = vst [vmem:[#allocation2] sm:$0xff] %v409
    %426 = vst [vmem:[#allocation2 + $0x8] sm:$0xff] %v410
    %427 = vst [vmem:[#allocation2 + $0x10] sm:$0xff] %v411
    %428 = vst [vmem:[#allocation2 + $0x18] sm:$0xff] %v412
    %429 = vst [vmem:[#allocation2 + $0x20] sm:$0xff] %v413
    %430 = vst [vmem:[#allocation2 + $0x28] sm:$0xff] %v414
    %431 = vst [vmem:[#allocation2 + $0x30] sm:$0xff] %v415
    %432 = vst [vmem:[#allocation2 + $0x38] sm:$0xff] %v416
    %433 = vst [vmem:[#allocation2 + $0x40] sm:$0xff] %v417
    %434 = vst [vmem:[#allocation2 + $0x48] sm:$0xff] %v418
    %435 = vst [vmem:[#allocation2 + $0x50] sm:$0xff] %v419
    %436 = vst [vmem:[#allocation2 + $0x58] sm:$0xff] %v420
    %437 = vst [vmem:[#allocation2 + $0x60] sm:$0xff] %v421
    %438 = vst [vmem:[#allocation2 + $0x68] sm:$0xff] %v422
    %439 = vst [vmem:[#allocation2 + $0x70] sm:$0xff] %v423
    %440 = vst [vmem:[#allocation2 + $0x78] sm:$0xff] %v424
    // Predicated region
    $region14: #{channel_attention_forward.1} parent=1 // pred_check
      _
    $region15: #{channel_attention_forward.1} parent=1 // pred_check_branch
      %442 = sbr.rel (0) target = $region17
    $region16: #{channel_attention_forward.1} parent=1 // pred_region
      %s444 = ssub.s32 2048, 2048
      %445 = vsyncadd [#allocation3], %s444
      %s446 = sshll.u32 [#allocation2], 4
      %s447 = int_to_ptr.vmem [resolvable:$true] %s446
      %452 = dma.vmem_to_hbm [thread:$0]  %s447, 2048, %s3, [#allocation3], 128, 128, 8
    $region17: #{channel_attention_forward.1} parent=1 // pred_fallthru
      _
    // Predicated region
    $region18: #{channel_attention_forward.1} parent=1 // pred_check
      _
    $region19: #{channel_attention_forward.1} parent=1 // pred_check_branch
      %454 = sbr.rel (0) target = $region21
    $region20: #{channel_attention_forward.1} parent=1 // pred_region
      %455 = dma.done [#allocation3], 2048
    $region21: #{channel_attention_forward.1} parent=1 // pred_fallthru
      _
    %456 = vsyncpa [#allocation3], 1

</llo_original>
